<compile_context>
chip_gen: v7x
topology: tpu7x:2x2x1
jax: 0.10.0
libtpu: 0.0.40
codegen_flags: <defaults>
</compile_context>

<pallas_src>
import jax
import jax.numpy as jnp
from jax import lax
from jax.experimental import pallas as pl
from jax.experimental.pallas import tpu as pltpu

# ---------------- config (roberta-base widths, small synthetic depth/seq) --------------
HIDDEN = 768
N_HEADS = 12
HEAD_DIM = HIDDEN // N_HEADS          # 64
GROUP_HEADS = 4                       # 4 heads / grid step -> 256-wide blocks (v6e/v7x MXU);
                                      # v5e's 128-wide MXU would prefer GROUP_HEADS = 2.
GROUP_W = GROUP_HEADS * HEAD_DIM      # 256
N_GROUPS = N_HEADS // GROUP_HEADS     # 3
FFN_DIM = 3072
N_LAYERS = 2          # NOTE: roberta-base has 12 encoder layers; 2 kept for a small run
VOCAB = 1000
MAX_SEQ = 8
TYPE_VOCAB = 2
NUM_CLASSES = 11      # np.unique(df['score']).shape[0]: toxicity scores 0..10
HEAD_PAD = 128        # classifier output padded to a full lane block
LN_EPS = 1e-5
DROPOUT_P = 0.3
TRAINING = True       # module calls Dropout in forward(); eval mode would be identity
ROW_TILE = 256        # 512 is fine on v5e/v6e (128 MiB VMEM); 256 kept for v7x safety


def _cp(sem=None):
    # 48 MiB scoped VMEM: safe on v7x (64 MiB physical) and plenty on v5e/v6e.
    return pltpu.CompilerParams(dimension_semantics=sem,
                                vmem_limit_bytes=48 * 1024 * 1024)


def _row_tile(m):
    return m if m < ROW_TILE else ROW_TILE


def _layernorm(x, g, b):
    mu = jnp.mean(x, axis=-1, keepdims=True)
    var = jnp.mean((x - mu) * (x - mu), axis=-1, keepdims=True)
    return (x - mu) * lax.rsqrt(var + LN_EPS) * g + b


def _gelu(x):
    # TODO(synk): HF roberta uses erf-based GELU; tanh approximation used here.
    c = 0.7978845608028654
    return 0.5 * x * (1.0 + jnp.tanh(c * (x + 0.044715 * x * x * x)))


# ---------------------------- embedding LayerNorm (f32 in, bf16 out) --------------------
def _emb_ln_kernel(x_ref, g_ref, b_ref, o_ref):
    o_ref[...] = _layernorm(x_ref[...].astype(jnp.float32),
                            g_ref[...], b_ref[...]).astype(o_ref.dtype)


def layernorm_rows(x, gamma, beta):
    M, H = x.shape
    tm = _row_tile(M)
    return pl.pallas_call(
        _emb_ln_kernel,
        out_shape=jax.ShapeDtypeStruct((M, H), jnp.bfloat16),
        grid=(pl.cdiv(M, tm),),
        in_specs=[pl.BlockSpec((tm, H), lambda i: (i, 0)),
                  pl.BlockSpec((1, H), lambda i: (0, 0)),
                  pl.BlockSpec((1, H), lambda i: (0, 0))],
        out_specs=pl.BlockSpec((tm, H), lambda i: (i, 0)),
        compiler_params=_cp(("parallel",)),
    )(x, gamma, beta)


# ---------------------------- fused packed-QKV projection + attention -------------------
def attention_block(x, mask_bias, w_qkv, b_qkv, *, B, S):
    """Grid over head GROUPS only.  Per step:
       - one (B*S, 768) x (768, 768) bf16 matmul producing [Q|K|V] for 4 heads
         (scale already folded into the Q columns),
       - per-batch, per-head softmax attention,
       - lane-dense (B*S, 256) bf16 output block already in concat-head layout."""
    M, H = x.shape                                            # M == B*S

    def kernel(x_ref, mb_ref, w_ref, b_ref, o_ref):
        qkv = jnp.dot(x_ref[...], w_ref[...],
                      preferred_element_type=jnp.float32) + b_ref[...]   # (M, 3*GROUP_W)
        q = qkv[:, 0:GROUP_W].astype(jnp.bfloat16)
        k = qkv[:, GROUP_W:2 * GROUP_W].astype(jnp.bfloat16)
        v = qkv[:, 2 * GROUP_W:3 * GROUP_W].astype(jnp.bfloat16)
        mb = mb_ref[...]                                                  # (B, S) f32 bias
        rows = []
        for b in range(B):
            r = slice(b * S, (b + 1) * S)
            neg = mb[b:b + 1, :]                                          # (1, S)
            heads = []
            for h in range(GROUP_HEADS):
                c = slice(h * HEAD_DIM, (h + 1) * HEAD_DIM)
                sc = lax.dot_general(q[r, c], k[r, c], (((1,), (1,)), ((), ())),
                                     preferred_element_type=jnp.float32)  # (S, S)
                sc = sc + neg
                sc = sc - jnp.max(sc, axis=-1, keepdims=True)
                p = jnp.exp(sc)
                p = p / jnp.sum(p, axis=-1, keepdims=True)
                heads.append(jnp.dot(p.astype(jnp.bfloat16), v[r, c],
                                     preferred_element_type=jnp.float32))  # (S, 64)
            rows.append(jnp.concatenate(heads, axis=1))                   # (S, GROUP_W)
        o_ref[...] = jnp.concatenate(rows, axis=0).astype(o_ref.dtype)

    ce = pl.CostEstimate(
        flops=2 * M * H * 3 * H + 4 * B * N_HEADS * S * S * HEAD_DIM,
        transcendentals=B * N_HEADS * S * S,
        bytes_accessed=2 * M * H * 2 + 3 * H * H * 2 + 3 * H * 4 + B * S * 4)

    return pl.pallas_call(
        kernel,
        out_shape=jax.ShapeDtypeStruct((M, H), jnp.bfloat16),
        grid=(N_GROUPS,),
        in_specs=[pl.BlockSpec((M, H), lambda g: (0, 0)),            # x, resident
                  pl.BlockSpec((B, S), lambda g: (0, 0)),            # key-mask bias
                  pl.BlockSpec((H, 3 * GROUP_W), lambda g: (0, g)),  # packed [Q|K|V] cols
                  pl.BlockSpec((1, 3 * GROUP_W), lambda g: (0, g))], # packed bias
        out_specs=pl.BlockSpec((M, GROUP_W), lambda g: (0, g)),
        compiler_params=_cp(("parallel",)),
        cost_estimate=ce,
    )(x, mask_bias, w_qkv, b_qkv)


# ------------- fused attn-out projection + residual + LN1 + FFN + residual + LN2 --------
def _proj_ffn_kernel(a_ref, x_ref, wao_ref, bao_ref, g1_ref, b1_ref,
                     wu_ref, bu_ref, wd_ref, bd_ref, g2_ref, b2_ref, o_ref):
    proj = jnp.dot(a_ref[...], wao_ref[...],
                   preferred_element_type=jnp.float32) + bao_ref[...]
    h1 = _layernorm(x_ref[...].astype(jnp.float32) + proj, g1_ref[...], b1_ref[...])
    u = _gelu(jnp.dot(h1.astype(jnp.bfloat16), wu_ref[...],
                      preferred_element_type=jnp.float32) + bu_ref[...])
    y = jnp.dot(u.astype(jnp.bfloat16), wd_ref[...],
                preferred_element_type=jnp.float32) + bd_ref[...]
    o_ref[...] = _layernorm(h1 + y, g2_ref[...], b2_ref[...]).astype(o_ref.dtype)


def proj_ffn_block(attn, x, lp):
    M, H = x.shape
    F = FFN_DIM
    tm = _row_tile(M)
    # NOTE(v7x): at demo M=16 this grid collapses to 1 step; at real batch sizes the
    # row-tiled parallel axis shards across both TensorCores.
    ce = pl.CostEstimate(
        flops=2 * M * H * H + 4 * M * H * F,
        transcendentals=M * F,
        bytes_accessed=3 * M * H * 2 + (H * H + 2 * H * F) * 2)
    row = pl.BlockSpec((tm, H), lambda i: (i, 0))
    vec_h = pl.BlockSpec((1, H), lambda i: (0, 0))
    vec_f = pl.BlockSpec((1, F), lambda i: (0, 0))
    return pl.pallas_call(
        _proj_ffn_kernel,
        out_shape=jax.ShapeDtypeStruct((M, H), jnp.bfloat16),
        grid=(pl.cdiv(M, tm),),
        in_specs=[row, row,
                  pl.BlockSpec((H, H), lambda i: (0, 0)), vec_h, vec_h, vec_h,
                  pl.BlockSpec((H, F), lambda i: (0, 0)), vec_f,
                  pl.BlockSpec((F, H), lambda i: (0, 0)), vec_h, vec_h, vec_h],
        out_specs=row,
        compiler_params=_cp(("parallel",)),
        cost_estimate=ce,
    )(attn, x, lp["w_ao"], lp["b_ao"], lp["ln1_g"], lp["ln1_b"],
      lp["w_up"], lp["b_up"], lp["w_dn"], lp["b_dn"], lp["ln2_g"], lp["ln2_b"])


# ---------------------------- fused classifier head (lane-padded output) ----------------
def _head_kernel(x_ref, dm_ref, w1_ref, b1_ref, w2_ref, b2_ref, o_ref):
    """pre_classifier -> ReLU -> Dropout(0.3) (mask supplied) -> classifier (padded)."""
    h = jnp.dot(x_ref[...], w1_ref[...],
                preferred_element_type=jnp.float32) + b1_ref[...]
    # TODO(synk): torch forward has `print(pooler)` here; pl.debug_print only prints
    # under interpret mode / log-recorder, so it is omitted.
    h = jnp.maximum(h, 0.0)                  # ReLU
    h = h * dm_ref[...]                      # inverted-dropout mask: 0 or 1/(1-p)
    o_ref[...] = jnp.dot(h.astype(jnp.bfloat16), w2_ref[...],
                         preferred_element_type=jnp.float32) + b2_ref[...]


def classifier_head(cls_tok, w1, b1, w2_pad, b2_pad, drop_mask):
    B, _ = cls_tok.shape
    C = w2_pad.shape[1]                      # HEAD_PAD (128), lane-dense store
    return pl.pallas_call(
        _head_kernel,
        out_shape=jax.ShapeDtypeStruct((B, C), jnp.float32),
        compiler_params=_cp(),
    )(cls_tok, drop_mask, w1, b1, w2_pad, b2_pad)


# ---------------------------- parameters (deterministic synthetic init) -----------------
def _pack_qkv(wq, wk, wv, bq, bk, bv):
    """Pack per-group column blocks [Wq_g | Wk_g | Wv_g]; softmax scale folded into Q."""
    scale = 1.0 / (HEAD_DIM ** 0.5)
    wq, bq = wq * scale, bq * scale
    wcols, bcols = [], []
    for g in range(N_GROUPS):
        sl = slice(g * GROUP_W, (g + 1) * GROUP_W)
        wcols += [wq[:, sl], wk[:, sl], wv[:, sl]]
        bcols += [bq[:, sl], bk[:, sl], bv[:, sl]]
    return (jnp.concatenate(wcols, axis=1).astype(jnp.bfloat16),
            jnp.concatenate(bcols, axis=1).astype(jnp.float32))


def init_params(key):
    def nrm(k, shape, scale=0.02):
        return scale * jax.random.normal(k, shape, dtype=jnp.float32)

    keys = iter(jax.random.split(key, 64))
    p = {
        "word_emb": nrm(next(keys), (VOCAB, HIDDEN)),
        "pos_emb": nrm(next(keys), (MAX_SEQ, HIDDEN)),
        "type_emb": nrm(next(keys), (TYPE_VOCAB, HIDDEN)),
        "emb_ln_g": jnp.ones((1, HIDDEN), jnp.float32),
        "emb_ln_b": jnp.zeros((1, HIDDEN), jnp.float32),
        "layers": [],
    }
    for _ in range(N_LAYERS):
        wq, wk, wv = (nrm(next(keys), (HIDDEN, HIDDEN)) for _ in range(3))
        zb = jnp.zeros((1, HIDDEN), jnp.float32)
        w_qkv, b_qkv = _pack_qkv(wq, wk, wv, zb, zb, zb)
        p["layers"].append({
            "w_qkv": w_qkv, "b_qkv": b_qkv,
            "w_ao": nrm(next(keys), (HIDDEN, HIDDEN)).astype(jnp.bfloat16),
            "b_ao": jnp.zeros((1, HIDDEN), jnp.float32),
            "ln1_g": jnp.ones((1, HIDDEN), jnp.float32),
            "ln1_b": jnp.zeros((1, HIDDEN), jnp.float32),
            "w_up": nrm(next(keys), (HIDDEN, FFN_DIM)).astype(jnp.bfloat16),
            "b_up": jnp.zeros((1, FFN_DIM), jnp.float32),
            "w_dn": nrm(next(keys), (FFN_DIM, HIDDEN)).astype(jnp.bfloat16),
            "b_dn": jnp.zeros((1, HIDDEN), jnp.float32),
            "ln2_g": jnp.ones((1, HIDDEN), jnp.float32),
            "ln2_b": jnp.zeros((1, HIDDEN), jnp.float32),
        })
    p["pre_cls_w"] = nrm(next(keys), (HIDDEN, HIDDEN)).astype(jnp.bfloat16)   # pre_classifier
    p["pre_cls_b"] = jnp.zeros((1, HIDDEN), jnp.float32)
    cls_w = nrm(next(keys), (HIDDEN, NUM_CLASSES))                            # classifier
    p["cls_w_pad"] = (jnp.zeros((HIDDEN, HEAD_PAD), jnp.float32)
                      .at[:, :NUM_CLASSES].set(cls_w).astype(jnp.bfloat16))
    p["cls_b_pad"] = jnp.zeros((1, HEAD_PAD), jnp.float32)
    return p


# ---------------------------- forward pass ----------------------------------------------
def toxicity_classifier_forward(params, input_ids, attention_mask, token_type_ids,
                                dropout_mask):
    B, S = input_ids.shape
    # embeddings: gathers are XLA glue; everything downstream runs in Pallas kernels.
    # TODO(synk): real roberta-base offsets positions by padding_idx+1; synthetic backbone skips it.
    x = (params["word_emb"][input_ids]
         + params["pos_emb"][jnp.arange(S)][None, :, :]
         + params["type_emb"][token_type_ids]).reshape(B * S, HIDDEN)
    x = layernorm_rows(x, params["emb_ln_g"], params["emb_ln_b"])        # bf16 from here on

    # additive key-mask bias, computed once (f32), reused by every layer / grid step
    mask_bias = (1.0 - attention_mask.astype(jnp.float32)) * -1e9        # (B, S)

    for lp in params["layers"]:
        attn = attention_block(x, mask_bias, lp["w_qkv"], lp["b_qkv"], B=B, S=S)
        x = proj_ffn_block(attn, x, lp)          # proj + res + LN1 + FFN + res + LN2

    hidden_state = x.reshape(B, S, HIDDEN)        # output_1[0]
    pooler_in = hidden_state[:, 0]                # hidden_state[:, 0]  (CLS token), bf16
    logits_pad = classifier_head(pooler_in, params["pre_cls_w"], params["pre_cls_b"],
                                 params["cls_w_pad"], params["cls_b_pad"], dropout_mask)
    return logits_pad[:, :NUM_CLASSES]


# ---------------------------- demo -------------------------------------------------------
if __name__ == "__main__":
    key = jax.random.PRNGKey(0)
    kp, kids, kdrop = jax.random.split(key, 3)
    params = init_params(kp)

    B, S = 2, MAX_SEQ
    input_ids = jax.random.randint(kids, (B, S), 0, VOCAB, dtype=jnp.int32)
    attention_mask = jnp.ones((B, S), jnp.int32).at[1, S - 2:].set(0)   # pad 2 tokens
    token_type_ids = jnp.zeros((B, S), jnp.int32)

    # Dropout(0.3), train mode: inverted-dropout mask generated outside the kernel.
    # TODO(synk): a training loop must feed a fresh key per step.
    if TRAINING:
        keep = jax.random.bernoulli(kdrop, 1.0 - DROPOUT_P, (B, HIDDEN))
        dropout_mask = keep.astype(jnp.float32) / (1.0 - DROPOUT_P)
    else:
        dropout_mask = jnp.ones((B, HIDDEN), jnp.float32)

    logits = toxicity_classifier_forward(params, input_ids, attention_mask,
                                         token_type_ids, dropout_mask)
    jax.block_until_ready(logits)
    assert logits.shape == (B, NUM_CLASSES) and logits.dtype == jnp.float32
    print("KERNEL_OK")
</pallas_src>

<mosaic_0001>
module attributes {stable_mosaic.version = 11 : i64} {
  func.func @_emb_ln_kernel(%arg0: i32, %arg1: memref<16x768xf32, #tpu.memory_space<vmem>>, %arg2: memref<1x768xf32, #tpu.memory_space<vmem>>, %arg3: memref<1x768xf32, #tpu.memory_space<vmem>>, %arg4: memref<16x768xbf16, #tpu.memory_space<vmem>>) attributes {dimension_semantics = [#tpu.dimension_semantics<parallel>], iteration_bounds = array<i64: 1>, scalar_prefetch = 0 : i64, scratch_operands = 0 : i64, tpu.core_type = #tpu.core_type<tc>, window_params = [{transform_indices = @transform_0, window_bounds = array<i64: 16, 768>}, {pipeline_mode = #tpu.pipeline_mode<synchronous>, transform_indices = @transform_1, window_bounds = array<i64: 1, 768>}, {pipeline_mode = #tpu.pipeline_mode<synchronous>, transform_indices = @transform_2, window_bounds = array<i64: 1, 768>}, {transform_indices = @transform_3, window_bounds = array<i64: 16, 768>}]} {
    %c0 = arith.constant 0 : index
    %c0_0 = arith.constant 0 : index
    %0 = vector.load %arg1[%c0, %c0_0] : memref<16x768xf32, #tpu.memory_space<vmem>>, vector<16x768xf32>
    %c0_1 = arith.constant 0 : index
    %c0_2 = arith.constant 0 : index
    %1 = vector.load %arg2[%c0_1, %c0_2] : memref<1x768xf32, #tpu.memory_space<vmem>>, vector<1x768xf32>
    %c0_3 = arith.constant 0 : index
    %c0_4 = arith.constant 0 : index
    %2 = vector.load %arg3[%c0_3, %c0_4] : memref<1x768xf32, #tpu.memory_space<vmem>>, vector<1x768xf32>
    %cst = arith.constant dense<0.000000e+00> : vector<16xf32>
    %3 = vector.multi_reduction <add>, %0, %cst [1] : vector<16x768xf32> to vector<16xf32>
    %4 = vector.shape_cast %3 : vector<16xf32> to vector<16x1xf32>
    %cst_5 = arith.constant 7.680000e+02 : f32
    %5 = vector.broadcast %cst_5 : f32 to vector<16x1xf32>
    %6 = arith.divf %4, %5 : vector<16x1xf32>
    %7 = vector.broadcast %6 : vector<16x1xf32> to vector<16x768xf32>
    %8 = arith.subf %0, %7 : vector<16x768xf32>
    %9 = vector.broadcast %6 : vector<16x1xf32> to vector<16x768xf32>
    %10 = arith.subf %0, %9 : vector<16x768xf32>
    %11 = arith.mulf %8, %10 : vector<16x768xf32>
    %cst_6 = arith.constant dense<0.000000e+00> : vector<16xf32>
    %12 = vector.multi_reduction <add>, %11, %cst_6 [1] : vector<16x768xf32> to vector<16xf32>
    %13 = vector.shape_cast %12 : vector<16xf32> to vector<16x1xf32>
    %cst_7 = arith.constant 7.680000e+02 : f32
    %14 = vector.broadcast %cst_7 : f32 to vector<16x1xf32>
    %15 = arith.divf %13, %14 : vector<16x1xf32>
    %16 = vector.broadcast %6 : vector<16x1xf32> to vector<16x768xf32>
    %17 = arith.subf %0, %16 : vector<16x768xf32>
    %cst_8 = arith.constant 9.99999974E-6 : f32
    %18 = vector.broadcast %cst_8 : f32 to vector<16x1xf32>
    %19 = arith.addf %15, %18 : vector<16x1xf32>
    %20 = math.rsqrt %19 : vector<16x1xf32>
    %21 = vector.broadcast %20 : vector<16x1xf32> to vector<16x768xf32>
    %22 = arith.mulf %17, %21 : vector<16x768xf32>
    %23 = vector.broadcast %1 : vector<1x768xf32> to vector<16x768xf32>
    %24 = arith.mulf %22, %23 : vector<16x768xf32>
    %25 = vector.broadcast %2 : vector<1x768xf32> to vector<16x768xf32>
    %26 = arith.addf %24, %25 : vector<16x768xf32>
    %27 = arith.truncf %26 : vector<16x768xf32> to vector<16x768xbf16>
    %c0_9 = arith.constant 0 : index
    %c0_10 = arith.constant 0 : index
    %28 = vector.load %arg4[%c0_9, %c0_10] : memref<16x768xbf16, #tpu.memory_space<vmem>>, vector<16x768xbf16>
    tpu.vector_store %arg4[%c0_9, %c0_10], %27 {strides = array<i32>} : memref<16x768xbf16, #tpu.memory_space<vmem>>, vector<16x768xbf16>,
    return
  }
  func.func @transform_0(%arg0: i32) -> (i32, i32) {
    %c0_i32 = arith.constant 0 : i32
    %c0_i32_0 = arith.constant 0 : i32
    return %arg0, %c0_i32 : i32, i32
  }
  func.func @transform_1(%arg0: i32) -> (i32, i32) {
    %c0_i32 = arith.constant 0 : i32
    %c0_i32_0 = arith.constant 0 : i32
    %c0_i32_1 = arith.constant 0 : i32
    return %c0_i32, %c0_i32_0 : i32, i32
  }
  func.func @transform_2(%arg0: i32) -> (i32, i32) {
    %c0_i32 = arith.constant 0 : i32
    %c0_i32_0 = arith.constant 0 : i32
    %c0_i32_1 = arith.constant 0 : i32
    return %c0_i32, %c0_i32_0 : i32, i32
  }
  func.func @transform_3(%arg0: i32) -> (i32, i32) {
    %c0_i32 = arith.constant 0 : i32
    %c0_i32_0 = arith.constant 0 : i32
    return %arg0, %c0_i32 : i32, i32
  }
}

</mosaic_0001>

<llo_original>
// kernel: tpu_custom_call.1
$region0: #{tpu_custom_call.1}
  #allocation0 [shape = 'u32[]', space=smem, size = 0x4, offset = 0x4, fixed_abs, tag = 'smem constant byte address 0x4 - core index']
  #allocation1 [shape = 'u32[144,128]{1,0:T(1,128)}', space=vmem, size = 0x12000, scoped, tag = 'internal scratch']
  %s0 = inlined_call_operand.hbm [shape: f32[16,768], index: 0, kind: input, shape index: {}]
  %s1 = inlined_call_operand.hbm [shape: f32[1,768], index: 1, kind: input, shape index: {}]
  %s2 = inlined_call_operand.vmem [shape: f32[1,768], index: 2, kind: input, shape index: {}]
  %s3 = inlined_call_operand.hbm [shape: bf16[16,768], index: 3, kind: output, shape index: {}]
  %s4 = sld [smem:[#allocation0]]
  $region30: #{tpu_custom_call.1} parent=0
    _
  %s6 = ssub.s32 1, %s4
  %s7 = scalar_select 0, %s6, %s4
  $region1: #{tpu_custom_call.1} parent=0
    #allocation2 [shape = 'u8[49152]{0}', space=vmem, size = 0xc000, scoped, tag = 'input window, operand 0, single buffered']
    #allocation3 [shape = 's32[1]{0}', space=sflag, size = 0x4, scoped, tag = 'scoped memory for tpu_custom_call.1']
    #allocation4 [shape = 's32[1]{0}', space=sflag, size = 0x4, scoped, tag = 'scoped memory for tpu_custom_call.1']
    #allocation5 [shape = 'u8[3072]{0}', space=vmem, size = 0xc00, scoped, tag = 'input window, operand 1, single buffered']
    #allocation6 [shape = 's32[1]{0}', space=sflag, size = 0x4, scoped, tag = 'scoped memory for tpu_custom_call.1']
    #allocation7 [shape = 'u8[24576]{0}', space=vmem, size = 0x6000, scoped, tag = 'output window, operand 0, single buffered']
    %8 = vsyncpa [#allocation3], 0
    %9 = vsyncpa [#allocation6], 0
    %10 = vsyncpa [#allocation4], 0
    // Predicated region
    $region2: #{tpu_custom_call.1} parent=1 // pred_check
      _
    $region3: #{tpu_custom_call.1} parent=1 // pred_check_branch
      %12 = sbr.rel (0) target = $region5
    $region4: #{tpu_custom_call.1} parent=1 // pred_region
      %s14 = ssub.s32 1536, 1536
      %15 = vsyncadd [#allocation3], %s14
      %s16 = sshll.u32 [#allocation2], 4
      %s17 = int_to_ptr.vmem [resolvable:$true] %s16
      %22 = dma.hbm_to_vmem [thread:$0]  %s0, 1536, %s17, [#allocation3], 768, 768, 48
    $region5: #{tpu_custom_call.1} parent=1 // pred_fallthru
      _
    // Predicated region
    $region6: #{tpu_custom_call.1} parent=1 // pred_check
      _
    $region7: #{tpu_custom_call.1} parent=1 // pred_check_branch
      %24 = sbr.rel (0) target = $region9
    $region8: #{tpu_custom_call.1} parent=1 // pred_region
      %s26 = ssub.s32 96, 96
      %27 = vsyncadd [#allocation6], %s26
      %s29 = sshll.u32 [#allocation5], 4
      %s30 = int_to_ptr.vmem [resolvable:$true] %s29
      %32 = dma.hbm_to_vmem [thread:$0]  %s1, 96, %s30, [#allocation6]
    $region9: #{tpu_custom_call.1} parent=1 // pred_fallthru
      _
    // Predicated region
    $region10: #{tpu_custom_call.1} parent=1 // pred_check
      _
    $region11: #{tpu_custom_call.1} parent=1 // pred_check_branch
      %34 = sbr.rel (0) target = $region13
    $region12: #{tpu_custom_call.1} parent=1 // pred_region
      _
    $region13: #{tpu_custom_call.1} parent=1 // pred_fallthru
      _
    // Predicated region
    $region14: #{tpu_custom_call.1} parent=1 // pred_check
      _
    $region15: #{tpu_custom_call.1} parent=1 // pred_check_branch
      %36 = sbr.rel (0) target = $region17
    $region16: #{tpu_custom_call.1} parent=1 // pred_region
      %37 = dma.done [#allocation3], 1536
    $region17: #{tpu_custom_call.1} parent=1 // pred_fallthru
      _
    // Predicated region
    $region18: #{tpu_custom_call.1} parent=1 // pred_check
      _
    $region19: #{tpu_custom_call.1} parent=1 // pred_check_branch
      %39 = sbr.rel (0) target = $region21
    $region20: #{tpu_custom_call.1} parent=1 // pred_region
      %40 = dma.done [#allocation6], 96
    $region21: #{tpu_custom_call.1} parent=1 // pred_fallthru
      _
    %v41 = vld [vmem:[#allocation2] sm:$0xff]
    %v42 = vld [vmem:[#allocation2 + $0x8] sm:$0xff]
    %v43 = vld [vmem:[#allocation2 + $0x10] sm:$0xff]
    %v44 = vld [vmem:[#allocation2 + $0x18] sm:$0xff]
    %v45 = vld [vmem:[#allocation2 + $0x20] sm:$0xff]
    %v46 = vld [vmem:[#allocation2 + $0x28] sm:$0xff]
    %v47 = vld [vmem:[#allocation2 + $0x30] sm:$0xff]
    %v48 = vld [vmem:[#allocation2 + $0x38] sm:$0xff]
    %v49 = vld [vmem:[#allocation2 + $0x40] sm:$0xff]
    %v50 = vld [vmem:[#allocation2 + $0x48] sm:$0xff]
    %v51 = vld [vmem:[#allocation2 + $0x50] sm:$0xff]
    %v52 = vld [vmem:[#allocation2 + $0x58] sm:$0xff]
    %v53 = vld [vmem:[#allocation5] sm:$0x3f]
    %v54 = vld [vmem:[%s2] sm:$0x3f]
    %v55 = vadd.f32 %v41, %v42
    %v56 = vadd.f32 %v55, %v43
    %v57 = vadd.f32 %v56, %v44
    %v58 = vadd.f32 %v57, %v45
    %v59 = vadd.f32 %v58, %v46
    %60 = vadd.xlane.f32.xlu0 %v59
    %v61 = vpop.xlane.xlu0 %60
    %v62 = vadd.f32 %v47, %v48
    %v63 = vadd.f32 %v62, %v49
    %v64 = vadd.f32 %v63, %v50
    %v65 = vadd.f32 %v64, %v51
    %v66 = vadd.f32 %v65, %v52
    %67 = vadd.xlane.f32.xlu0 %v66
    %v68 = vpop.xlane.xlu0 %67
    %v69 = vrcp.pop 768.0
    %v70 = vmul.f32 %v61, %v69
    %v71 = vmul.f32 %v68, %v69
    %v72 = vsub.f32 %v41, %v70
    %v73 = vsub.f32 %v42, %v70
    %v74 = vsub.f32 %v43, %v70
    %v75 = vsub.f32 %v44, %v70
    %v76 = vsub.f32 %v45, %v70
    %v77 = vsub.f32 %v46, %v70
    %v78 = vsub.f32 %v47, %v71
    %v79 = vsub.f32 %v48, %v71
    %v80 = vsub.f32 %v49, %v71
    %v81 = vsub.f32 %v50, %v71
    %v82 = vsub.f32 %v51, %v71
    %v83 = vsub.f32 %v52, %v71
    %v84 = vmul.f32 %v72, %v72
    %v85 = vmul.f32 %v73, %v73
    %v86 = vmul.f32 %v74, %v74
    %v87 = vmul.f32 %v75, %v75
    %v88 = vmul.f32 %v76, %v76
    %v89 = vmul.f32 %v77, %v77
    %v90 = vmul.f32 %v78, %v78
    %v91 = vmul.f32 %v79, %v79
    %v92 = vmul.f32 %v80, %v80
    %v93 = vmul.f32 %v81, %v81
    %v94 = vmul.f32 %v82, %v82
    %v95 = vmul.f32 %v83, %v83
    %v96 = vadd.f32 %v84, %v85
    %v97 = vadd.f32 %v96, %v86
    %v98 = vadd.f32 %v97, %v87
    %v99 = vadd.f32 %v98, %v88
    %v100 = vadd.f32 %v99, %v89
    %101 = vadd.xlane.f32.xlu0 %v100
    %v102 = vpop.xlane.xlu0 %101
    %v103 = vadd.f32 %v90, %v91
    %v104 = vadd.f32 %v103, %v92
    %v105 = vadd.f32 %v104, %v93
    %v106 = vadd.f32 %v105, %v94
    %v107 = vadd.f32 %v106, %v95
    %108 = vadd.xlane.f32.xlu0 %v107
    %v109 = vpop.xlane.xlu0 %108
    %v110 = vmul.f32 %v102, %v69
    %v111 = vmul.f32 %v109, %v69
    %v112 = vadd.f32 %v110, 1e-05
    %v113 = vadd.f32 %v111, 1e-05
    %v114 = vrsqrt.pop %v112
    %v115 = vrsqrt.pop %v113
    %v116 = vmul.f32 %v72, %v114
    %v117 = vmul.f32 %v73, %v114
    %v118 = vmul.f32 %v74, %v114
    %v119 = vmul.f32 %v75, %v114
    %v120 = vmul.f32 %v76, %v114
    %v121 = vmul.f32 %v77, %v114
    %v122 = vmul.f32 %v78, %v115
    %v123 = vmul.f32 %v79, %v115
    %v124 = vmul.f32 %v80, %v115
    %v125 = vmul.f32 %v81, %v115
    %v126 = vmul.f32 %v82, %v115
    %v127 = vmul.f32 %v83, %v115
    %v129 = vlaneseq
    %v130 = vshrl.u32 %v129, 7
    %v131 = vsub.s32 0, %v130
    %v132 = vrot.slane %v53, %v131
    %v133 = vlaneseq
    %v134 = vshrl.u32 %v133, 7
    %v135 = vsub.s32 1, %v134
    %v136 = vrot.slane %v53, %v135
    %v137 = vlaneseq
    %v138 = vshrl.u32 %v137, 7
    %v139 = vsub.s32 2, %v138
    %v140 = vrot.slane %v53, %v139
    %v141 = vlaneseq
    %v142 = vshrl.u32 %v141, 7
    %v143 = vsub.s32 3, %v142
    %v144 = vrot.slane %v53, %v143
    %v145 = vlaneseq
    %v146 = vshrl.u32 %v145, 7
    %v147 = vsub.s32 4, %v146
    %v148 = vrot.slane %v53, %v147
    %v149 = vlaneseq
    %v150 = vshrl.u32 %v149, 7
    %v151 = vsub.s32 5, %v150
    %v152 = vrot.slane %v53, %v151
    %v159 = vmul.f32 %v116, %v132
    %v160 = vmul.f32 %v117, %v136
    %v161 = vmul.f32 %v118, %v140
    %v162 = vmul.f32 %v119, %v144
    %v163 = vmul.f32 %v120, %v148
    %v164 = vmul.f32 %v121, %v152
    %v165 = vmul.f32 %v122, %v132
    %v166 = vmul.f32 %v123, %v136
    %v167 = vmul.f32 %v124, %v140
    %v168 = vmul.f32 %v125, %v144
    %v169 = vmul.f32 %v126, %v148
    %v170 = vmul.f32 %v127, %v152
    %v172 = vlaneseq
    %v173 = vshrl.u32 %v172, 7
    %v174 = vsub.s32 0, %v173
    %v175 = vrot.slane %v54, %v174
    %v176 = vlaneseq
    %v177 = vshrl.u32 %v176, 7
    %v178 = vsub.s32 1, %v177
    %v179 = vrot.slane %v54, %v178
    %v180 = vlaneseq
    %v181 = vshrl.u32 %v180, 7
    %v182 = vsub.s32 2, %v181
    %v183 = vrot.slane %v54, %v182
    %v184 = vlaneseq
    %v185 = vshrl.u32 %v184, 7
    %v186 = vsub.s32 3, %v185
    %v187 = vrot.slane %v54, %v186
    %v188 = vlaneseq
    %v189 = vshrl.u32 %v188, 7
    %v190 = vsub.s32 4, %v189
    %v191 = vrot.slane %v54, %v190
    %v192 = vlaneseq
    %v193 = vshrl.u32 %v192, 7
    %v194 = vsub.s32 5, %v193
    %v195 = vrot.slane %v54, %v194
    %v202 = vadd.f32 %v159, %v175
    %v203 = vadd.f32 %v160, %v179
    %v204 = vadd.f32 %v161, %v183
    %v205 = vadd.f32 %v162, %v187
    %v206 = vadd.f32 %v163, %v191
    %v207 = vadd.f32 %v164, %v195
    %v208 = vadd.f32 %v165, %v175
    %v209 = vadd.f32 %v166, %v179
    %v210 = vadd.f32 %v167, %v183
    %v211 = vadd.f32 %v168, %v187
    %v212 = vadd.f32 %v169, %v191
    %v213 = vadd.f32 %v170, %v195
    %v214 = vpack.c.bf16 %v208, %v202
    %v215 = vpack.c.bf16 %v209, %v203
    %v216 = vpack.c.bf16 %v210, %v204
    %v217 = vpack.c.bf16 %v211, %v205
    %v218 = vpack.c.bf16 %v212, %v206
    %v219 = vpack.c.bf16 %v213, %v207
    %v226 = vunpack.c.l.b16 %v214
    %v227 = vunpack.c.l.b16 %v215
    %v228 = vunpack.c.l.b16 %v216
    %v229 = vunpack.c.l.b16 %v217
    %v230 = vunpack.c.l.b16 %v218
    %v231 = vunpack.c.l.b16 %v219
    %v232 = vunpack.c.h.b16 %v214
    %v233 = vunpack.c.h.b16 %v215
    %v234 = vunpack.c.h.b16 %v216
    %v235 = vunpack.c.h.b16 %v217
    %v236 = vunpack.c.h.b16 %v218
    %v237 = vunpack.c.h.b16 %v219
    %v238 = vpack.c.b16 %v227, %v226
    %v239 = vpack.c.b16 %v229, %v228
    %v240 = vpack.c.b16 %v231, %v230
    %v241 = vpack.c.b16 %v233, %v232
    %v242 = vpack.c.b16 %v235, %v234
    %v243 = vpack.c.b16 %v237, %v236
    %250 = vst [vmem:[#allocation7] sm:$0xff] %v238
    %251 = vst [vmem:[#allocation7 + $0x8] sm:$0xff] %v239
    %252 = vst [vmem:[#allocation7 + $0x10] sm:$0xff] %v240
    %253 = vst [vmem:[#allocation7 + $0x18] sm:$0xff] %v241
    %254 = vst [vmem:[#allocation7 + $0x20] sm:$0xff] %v242
    %255 = vst [vmem:[#allocation7 + $0x28] sm:$0xff] %v243
    // Predicated region
    $region22: #{tpu_custom_call.1} parent=1 // pred_check
      _
    $region23: #{tpu_custom_call.1} parent=1 // pred_check_branch
      %257 = sbr.rel (0) target = $region25
    $region24: #{tpu_custom_call.1} parent=1 // pred_region
      %s259 = ssub.s32 768, 768
      %260 = vsyncadd [#allocation4], %s259
      %s261 = sshll.u32 [#allocation7], 4
      %s262 = int_to_ptr.vmem [resolvable:$true] %s261
      %267 = dma.vmem_to_hbm [thread:$0]  %s262, 768, %s3, [#allocation4], 384, 384, 24
    $region25: #{tpu_custom_call.1} parent=1 // pred_fallthru
      _
    // Predicated region
    $region26: #{tpu_custom_call.1} parent=1 // pred_check
      _
    $region27: #{tpu_custom_call.1} parent=1 // pred_check_branch
      %269 = sbr.rel (0) target = $region29
    $region28: #{tpu_custom_call.1} parent=1 // pred_region
      %270 = dma.done [#allocation4], 768
    $region29: #{tpu_custom_call.1} parent=1 // pred_fallthru
      _
    %271 = vsyncpa [#allocation3], 1
    %272 = vsyncpa [#allocation6], 1
    %273 = vsyncpa [#allocation4], 1

</llo_original>
